<compile_context>
chip_gen: v7x
topology: tpu7x:2x2x1
jax: 0.10.0
libtpu: 0.0.40
codegen_flags: <defaults>
</compile_context>

<pallas_src>
import functools
import math

import jax
import jax.numpy as jnp
from jax import lax
from jax.experimental import pallas as pl
from jax.experimental.pallas import tpu as pltpu


# ---------------------------------------------------------------------------
# Kernels
# ---------------------------------------------------------------------------

def _ln_rows_kernel(x_ref, w_ref, b_ref, o_ref, *, eps, inv_c):
    """channels_last plain: x_ref is (TM, C); normalize each row over lanes."""
    # NOTE: when M % TM != 0 the last block reads rows past the array end.
    # Those rows hold unspecified data and may produce NaN/Inf internally,
    # but their stores are masked by Pallas, so the result is unaffected.
    x = x_ref[...].astype(jnp.float32)
    sum_x = jnp.sum(x, axis=-1, keepdims=True)
    sum_x2 = jnp.sum(x * x, axis=-1, keepdims=True)
    mean = sum_x * inv_c
    var = jnp.maximum(sum_x2 * inv_c - mean * mean, 0.0)
    inv = lax.rsqrt(var + eps)
    w = w_ref[...].astype(jnp.float32)   # (1, C)
    b = b_ref[...].astype(jnp.float32)   # (1, C)
    o_ref[...] = ((x - mean) * inv * w + b).astype(o_ref.dtype)


def _ln_rows_packed_kernel(x_ref, w_ref, b_ref, o_ref, *, eps, inv_c,
                           groups, csize):
    """channels_last packed: x_ref is (TM, G*C); each row holds G independent
    normalization groups of C contiguous lanes.  Segment reductions and the
    per-group broadcasts are 0/1 matmuls on the MXU so the VPU/store path is
    fully lane-dense even for tiny C.  Garbage rows from a partial last block
    only affect their own (masked) output rows."""
    x = x_ref[...].astype(jnp.float32)                       # (TM, GC)
    gc = groups * csize

    # 0/1 segment matrices built from iota + compares (no integer division).
    lane = lax.broadcasted_iota(jnp.int32, (gc, groups), 0)
    grp = lax.broadcasted_iota(jnp.int32, (gc, groups), 1) * csize
    seg = ((lane >= grp) & (lane < grp + csize)).astype(jnp.float32)      # (GC, G)
    lane_t = lax.broadcasted_iota(jnp.int32, (groups, gc), 1)
    grp_t = lax.broadcasted_iota(jnp.int32, (groups, gc), 0) * csize
    seg_t = ((lane_t >= grp_t) & (lane_t < grp_t + csize)).astype(jnp.float32)  # (G, GC)

    dot = functools.partial(jnp.dot, precision=lax.Precision.HIGHEST,
                            preferred_element_type=jnp.float32)
    sum_x = dot(x, seg)                                      # (TM, G)
    sum_x2 = dot(x * x, seg)                                 # (TM, G)
    mean = sum_x * inv_c
    var = jnp.maximum(sum_x2 * inv_c - mean * mean, 0.0)
    inv = lax.rsqrt(var + eps)
    mean_f = dot(mean, seg_t)                                # (TM, GC)
    inv_f = dot(inv, seg_t)                                  # (TM, GC)

    w = w_ref[...].astype(jnp.float32)                       # (1, GC)
    b = b_ref[...].astype(jnp.float32)                       # (1, GC)
    o_ref[...] = ((x - mean_f) * inv_f * w + b).astype(o_ref.dtype)


def _ln_cf_kernel(x_ref, w_ref, b_ref, o_ref, *, eps, inv_c):
    """channels_first: x_ref is (1, C, T); normalize each lane column over C."""
    x = x_ref[...].astype(jnp.float32)
    sum_x = jnp.sum(x, axis=1, keepdims=True)        # sublane reduce (XLU)
    sum_x2 = jnp.sum(x * x, axis=1, keepdims=True)
    mean = sum_x * inv_c
    var = jnp.maximum(sum_x2 * inv_c - mean * mean, 0.0)
    inv = lax.rsqrt(var + eps)
    w = w_ref[...].astype(jnp.float32)   # (1, C, 1)
    b = b_ref[...].astype(jnp.float32)   # (1, C, 1)
    o_ref[...] = ((x - mean) * inv * w + b).astype(o_ref.dtype)


# ---------------------------------------------------------------------------
# Tile sizing
# ---------------------------------------------------------------------------

# ~4 MiB per x block: tiled streaming reaches ~85% of HBM roofline at 512+
# rows; double-buffered in+out stays well under v7x's 64 MiB VMEM.
_TARGET_BLOCK_BYTES = 4 << 20


def _round_down(v, m):
    return max(m, (v // m) * m)


def _pick_tile(extent, bytes_per_step, granule, min_blocks):
    """Tile size along `extent` (multiple of `granule`), ~target block bytes."""
    if extent <= granule:
        return extent  # full dim; legal even if < granule (masked stores)
    t = _round_down(_TARGET_BLOCK_BYTES // max(1, bytes_per_step), granule)
    t = min(t, pl.cdiv(extent, granule) * granule)
    # Keep enough grid blocks to feed both v7x TensorCores and amortize the
    # ~0.35 us per-step overhead; never drop below one granule.
    while t > granule and pl.cdiv(extent, t) < min_blocks:
        t = _round_down(t // 2, granule)
    return t


def _vmem_limit(block_bytes):
    # 2 arrays (in + out) x 2 buffers + weight/bias + slack, clamped so it is
    # always safe on v7x's 64 MiB physical VMEM.
    return int(min(max(4 * block_bytes + (4 << 20), 16 << 20), 48 << 20))


def _pack_groups(M, C):
    """How many LN groups to pack per lane-dense row for channels_last.

    Returns G > 1 only when the packed row width G*C is a multiple of 128
    lanes, stays <= 512 lanes (bounds the MXU segment-matmul cost, which grows
    with G), and M is divisible by G (free reshape).  Otherwise 1 (plain path).
    """
    if C >= 128:
        return 1
    g = math.lcm(C, 128) // C
    if g <= 1 or g * C > 512 or M % g != 0:
        return 1
    return g


# ---------------------------------------------------------------------------
# Wrappers
# ---------------------------------------------------------------------------

def _layernorm_channels_last_2d(x2d, weight, bias, eps):
    """x2d: (M, C); normalize each row over C."""
    M, C = x2d.shape
    elt = x2d.dtype.itemsize
    G = _pack_groups(M, C)

    if G > 1:
        # ---- packed, lane-dense path (small C) ----
        GC = G * C
        MP = M // G
        xp = x2d.reshape(MP, GC)          # free: same contiguous buffer
        tm = _pick_tile(MP, GC * elt, 8, min_blocks=4)
        grid_m = pl.cdiv(MP, tm)

        w2d = jnp.tile(weight, G).reshape(1, GC)
        b2d = jnp.tile(bias, G).reshape(1, GC)

        kernel = functools.partial(_ln_rows_packed_kernel, eps=eps,
                                   inv_c=1.0 / C, groups=G, csize=C)
        cost = pl.CostEstimate(
            flops=(7 + 8 * G) * M * C,
            transcendentals=M,
            bytes_accessed=2 * M * C * elt + 2 * GC * weight.dtype.itemsize,
        )
        y = pl.pallas_call(
            kernel,
            out_shape=jax.ShapeDtypeStruct((MP, GC), x2d.dtype),
            grid_spec=pltpu.PrefetchScalarGridSpec(
                num_scalar_prefetch=0,
                grid=(grid_m,),
                in_specs=[
                    pl.BlockSpec((tm, GC), lambda i: (i, 0)),
                    pl.BlockSpec((1, GC), lambda i: (0, 0)),
                    pl.BlockSpec((1, GC), lambda i: (0, 0)),
                ],
                out_specs=pl.BlockSpec((tm, GC), lambda i: (i, 0)),
            ),
            compiler_params=pltpu.CompilerParams(
                dimension_semantics=("parallel",),
                vmem_limit_bytes=_vmem_limit(tm * GC * elt),
            ),
            cost_estimate=cost,
        )(xp, w2d, b2d)
        return y.reshape(M, C)

    # ---- plain path (C >= 128 or packing not applicable) ----
    tm = _pick_tile(M, C * elt, 8, min_blocks=4)
    grid_m = pl.cdiv(M, tm)

    w2d = weight.reshape(1, C)
    b2d = bias.reshape(1, C)

    kernel = functools.partial(_ln_rows_kernel, eps=eps, inv_c=1.0 / C)
    cost = pl.CostEstimate(
        flops=7 * M * C,
        transcendentals=M,
        bytes_accessed=2 * M * C * elt + 2 * C * weight.dtype.itemsize,
    )
    return pl.pallas_call(
        kernel,
        out_shape=jax.ShapeDtypeStruct((M, C), x2d.dtype),
        grid_spec=pltpu.PrefetchScalarGridSpec(
            num_scalar_prefetch=0,
            grid=(grid_m,),
            in_specs=[
                pl.BlockSpec((tm, C), lambda i: (i, 0)),
                pl.BlockSpec((1, C), lambda i: (0, 0)),
                pl.BlockSpec((1, C), lambda i: (0, 0)),
            ],
            out_specs=pl.BlockSpec((tm, C), lambda i: (i, 0)),
        ),
        compiler_params=pltpu.CompilerParams(
            dimension_semantics=("parallel",),
            vmem_limit_bytes=_vmem_limit(tm * C * elt),
        ),
        cost_estimate=cost,
    )(x2d, w2d, b2d)


def _layernorm_channels_first(x, weight, bias, eps):
    """x: (N, C, H, W); normalize over axis 1 with NO transposes.

    View x as (N, C, H*W): H*W maps to lanes (lane-dense loads/stores even for
    small C) and the channel reduction happens over the sublane axis.
    """
    N, C, H, W = x.shape
    L = H * W
    x3 = x.reshape(N, C, L)          # free (contiguous view)
    elt = x.dtype.itemsize

    min_hw_blocks = max(1, -(-4 // N))      # total blocks N * n_hw >= ~4
    t = _pick_tile(L, C * elt, 128, min_blocks=min_hw_blocks)
    grid = (N, pl.cdiv(L, t))

    w3 = weight.reshape(1, C, 1)
    b3 = bias.reshape(1, C, 1)

    kernel = functools.partial(_ln_cf_kernel, eps=eps, inv_c=1.0 / C)
    cost = pl.CostEstimate(
        flops=7 * N * C * L,
        transcendentals=N * L,
        bytes_accessed=2 * N * C * L * elt + 2 * C * weight.dtype.itemsize,
    )
    y = pl.pallas_call(
        kernel,
        out_shape=jax.ShapeDtypeStruct((N, C, L), x.dtype),
        grid_spec=pltpu.PrefetchScalarGridSpec(
            num_scalar_prefetch=0,
            grid=grid,
            in_specs=[
                pl.BlockSpec((1, C, t), lambda n, j: (n, 0, j)),
                pl.BlockSpec((1, C, 1), lambda n, j: (0, 0, 0)),
                pl.BlockSpec((1, C, 1), lambda n, j: (0, 0, 0)),
            ],
            out_specs=pl.BlockSpec((1, C, t), lambda n, j: (n, 0, j)),
        ),
        compiler_params=pltpu.CompilerParams(
            dimension_semantics=("parallel", "parallel"),
            vmem_limit_bytes=_vmem_limit(C * t * elt),
        ),
        cost_estimate=cost,
    )(x3, w3, b3)
    return y.reshape(N, C, H, W)


def layer_norm(x, weight, bias, eps=1e-6, data_format="channels_last"):
    """Pallas LayerNorm matching the PyTorch module semantics."""
    if data_format not in ("channels_last", "channels_first"):
        raise NotImplementedError
    if data_format == "channels_last":
        # x: (..., C), normalize over last axis (== F.layer_norm).
        C = x.shape[-1]
        lead = x.shape[:-1]
        y = _layernorm_channels_last_2d(x.reshape(-1, C), weight, bias, eps)
        return y.reshape(*lead, C)
    else:
        # x: (N, C, H, W), normalize over axis 1 (manual branch in the module).
        return _layernorm_channels_first(x, weight, bias, eps)


# ---------------------------------------------------------------------------
# Pure-JAX references + self-test
# ---------------------------------------------------------------------------

def _reference_channels_first(x, weight, bias, eps):
    u = jnp.mean(x, axis=1, keepdims=True)
    s = jnp.mean((x - u) ** 2, axis=1, keepdims=True)
    xn = (x - u) / jnp.sqrt(s + eps)
    return weight[None, :, None, None] * xn + bias[None, :, None, None]


def _reference_channels_last(x, weight, bias, eps):
    u = jnp.mean(x, axis=-1, keepdims=True)
    s = jnp.mean((x - u) ** 2, axis=-1, keepdims=True)
    xn = (x - u) / jnp.sqrt(s + eps)
    return weight * xn + bias


if __name__ == "__main__":
    key = jax.random.PRNGKey(0)
    N, C, H, W = 2, 4, 16, 16
    eps = 1e-6

    # Parameters per nn.Module.__init__: weight = ones(C), bias = zeros(C).
    weight = jnp.ones((C,), dtype=jnp.float32)
    bias = jnp.zeros((C,), dtype=jnp.float32)

    k1, k2, k3 = jax.random.split(key, 3)

    # channels_first input (NCHW, conv layout).
    x_cf = jax.random.normal(k1, (N, C, H, W), dtype=jnp.float32)
    y_cf = layer_norm(x_cf, weight, bias, eps, data_format="channels_first")
    y_cf = jax.block_until_ready(y_cf)
    ref_cf = _reference_channels_first(x_cf, weight, bias, eps)
    assert jnp.allclose(y_cf, ref_cf, atol=1e-5, rtol=1e-5)

    # channels_last input (NHWC) — exercises the packed lane-dense path (C=4).
    x_cl = jax.random.normal(k2, (N, H, W, C), dtype=jnp.float32)
    y_cl = layer_norm(x_cl, weight, bias, eps, data_format="channels_last")
    y_cl = jax.block_until_ready(y_cl)
    ref_cl = _reference_channels_last(x_cl, weight, bias, eps)
    assert jnp.allclose(y_cl, ref_cl, atol=1e-5, rtol=1e-5)

    # channels_last with a wide channel count — exercises the plain fallback.
    C2 = 160
    w2 = jnp.ones((C2,), dtype=jnp.float32)
    b2 = jnp.zeros((C2,), dtype=jnp.float32)
    x_cl2 = jax.random.normal(k3, (2, 8, 8, C2), dtype=jnp.float32)
    y_cl2 = layer_norm(x_cl2, w2, b2, eps, data_format="channels_last")
    y_cl2 = jax.block_until_ready(y_cl2)
    ref_cl2 = _reference_channels_last(x_cl2, w2, b2, eps)
    assert jnp.allclose(y_cl2, ref_cl2, atol=1e-5, rtol=1e-5)

    print("KERNEL_OK")
</pallas_src>

<mosaic_0001>
module attributes {stable_mosaic.version = 11 : i64} {
  func.func @_ln_cf_kernel(%arg0: i32, %arg1: i32, %arg2: memref<1x4x128xf32, #tpu.memory_space<vmem>>, %arg3: memref<1x4x1xf32, #tpu.memory_space<vmem>>, %arg4: memref<1x4x1xf32, #tpu.memory_space<vmem>>, %arg5: memref<1x4x128xf32, #tpu.memory_space<vmem>>) attributes {dimension_semantics = [#tpu.dimension_semantics<parallel>, #tpu.dimension_semantics<parallel>], iteration_bounds = array<i64: 2, 2>, scalar_prefetch = 0 : i64, scratch_operands = 0 : i64, tpu.core_type = #tpu.core_type<tc>, window_params = [{transform_indices = @transform_0, window_bounds = array<i64: 1, 4, 128>}, {pipeline_mode = #tpu.pipeline_mode<synchronous>, transform_indices = @transform_1, window_bounds = array<i64: 1, 4, 1>}, {pipeline_mode = #tpu.pipeline_mode<synchronous>, transform_indices = @transform_2, window_bounds = array<i64: 1, 4, 1>}, {transform_indices = @transform_3, window_bounds = array<i64: 1, 4, 128>}]} {
    %c0 = arith.constant 0 : index
    %c0_0 = arith.constant 0 : index
    %c0_1 = arith.constant 0 : index
    %0 = vector.load %arg2[%c0, %c0_0, %c0_1] : memref<1x4x128xf32, #tpu.memory_space<vmem>>, vector<1x4x128xf32>
    %cst = arith.constant dense<0.000000e+00> : vector<1x128xf32>
    %1 = vector.multi_reduction <add>, %0, %cst [1] : vector<1x4x128xf32> to vector<1x128xf32>
    %2 = vector.shape_cast %1 : vector<1x128xf32> to vector<1x1x128xf32>
    %3 = arith.mulf %0, %0 : vector<1x4x128xf32>
    %cst_2 = arith.constant dense<0.000000e+00> : vector<1x128xf32>
    %4 = vector.multi_reduction <add>, %3, %cst_2 [1] : vector<1x4x128xf32> to vector<1x128xf32>
    %5 = vector.shape_cast %4 : vector<1x128xf32> to vector<1x1x128xf32>
    %cst_3 = arith.constant 2.500000e-01 : f32
    %6 = vector.broadcast %cst_3 : f32 to vector<1x1x128xf32>
    %7 = arith.mulf %2, %6 : vector<1x1x128xf32>
    %cst_4 = arith.constant 2.500000e-01 : f32
    %8 = vector.broadcast %cst_4 : f32 to vector<1x1x128xf32>
    %9 = arith.mulf %5, %8 : vector<1x1x128xf32>
    %10 = arith.mulf %7, %7 : vector<1x1x128xf32>
    %11 = arith.subf %9, %10 : vector<1x1x128xf32>
    %cst_5 = arith.constant 0.000000e+00 : f32
    %12 = vector.broadcast %cst_5 : f32 to vector<1x1x128xf32>
    %13 = arith.maximumf %11, %12 : vector<1x1x128xf32>
    %cst_6 = arith.constant 9.99999997E-7 : f32
    %14 = vector.broadcast %cst_6 : f32 to vector<1x1x128xf32>
    %15 = arith.addf %13, %14 : vector<1x1x128xf32>
    %16 = math.rsqrt %15 : vector<1x1x128xf32>
    %c0_7 = arith.constant 0 : index
    %c0_8 = arith.constant 0 : index
    %c0_9 = arith.constant 0 : index
    %17 = vector.load %arg3[%c0_7, %c0_8, %c0_9] : memref<1x4x1xf32, #tpu.memory_space<vmem>>, vector<1x4x1xf32>
    %c0_10 = arith.constant 0 : index
    %c0_11 = arith.constant 0 : index
    %c0_12 = arith.constant 0 : index
    %18 = vector.load %arg4[%c0_10, %c0_11, %c0_12] : memref<1x4x1xf32, #tpu.memory_space<vmem>>, vector<1x4x1xf32>
    %19 = vector.broadcast %7 : vector<1x1x128xf32> to vector<1x4x128xf32>
    %20 = arith.subf %0, %19 : vector<1x4x128xf32>
    %21 = vector.broadcast %16 : vector<1x1x128xf32> to vector<1x4x128xf32>
    %22 = arith.mulf %20, %21 : vector<1x4x128xf32>
    %23 = vector.broadcast %17 : vector<1x4x1xf32> to vector<1x4x128xf32>
    %24 = arith.mulf %22, %23 : vector<1x4x128xf32>
    %25 = vector.broadcast %18 : vector<1x4x1xf32> to vector<1x4x128xf32>
    %26 = arith.addf %24, %25 : vector<1x4x128xf32>
    %c0_13 = arith.constant 0 : index
    %c0_14 = arith.constant 0 : index
    %c0_15 = arith.constant 0 : index
    %27 = vector.load %arg5[%c0_13, %c0_14, %c0_15] : memref<1x4x128xf32, #tpu.memory_space<vmem>>, vector<1x4x128xf32>
    tpu.vector_store %arg5[%c0_13, %c0_14, %c0_15], %26 {strides = array<i32>} : memref<1x4x128xf32, #tpu.memory_space<vmem>>, vector<1x4x128xf32>,
    return
  }
  func.func @transform_0(%arg0: i32, %arg1: i32) -> (i32, i32, i32) {
    %c0_i32 = arith.constant 0 : i32
    %c0_i32_0 = arith.constant 0 : i32
    return %arg0, %c0_i32, %arg1 : i32, i32, i32
  }
  func.func @transform_1(%arg0: i32, %arg1: i32) -> (i32, i32, i32) {
    %c0_i32 = arith.constant 0 : i32
    %c0_i32_0 = arith.constant 0 : i32
    %c0_i32_1 = arith.constant 0 : i32
    %c0_i32_2 = arith.constant 0 : i32
    return %c0_i32, %c0_i32_0, %c0_i32_1 : i32, i32, i32
  }
  func.func @transform_2(%arg0: i32, %arg1: i32) -> (i32, i32, i32) {
    %c0_i32 = arith.constant 0 : i32
    %c0_i32_0 = arith.constant 0 : i32
    %c0_i32_1 = arith.constant 0 : i32
    %c0_i32_2 = arith.constant 0 : i32
    return %c0_i32, %c0_i32_0, %c0_i32_1 : i32, i32, i32
  }
  func.func @transform_3(%arg0: i32, %arg1: i32) -> (i32, i32, i32) {
    %c0_i32 = arith.constant 0 : i32
    %c0_i32_0 = arith.constant 0 : i32
    return %arg0, %c0_i32, %arg1 : i32, i32, i32
  }
}

</mosaic_0001>

<llo_original>
// kernel: tpu_custom_call.1
$region0: #{tpu_custom_call.1}
  #allocation0 [shape = 'u32[]', space=smem, size = 0x4, offset = 0x4, fixed_abs, tag = 'smem constant byte address 0x4 - core index']
  #allocation1 [shape = 'u32[144,128]{1,0:T(1,128)}', space=vmem, size = 0x12000, scoped, tag = 'internal scratch']
  %s0 = inlined_call_operand.hbm [shape: f32[2,4,256], index: 0, kind: input, shape index: {}]
  %s1 = inlined_call_operand.vmem [shape: f32[1,4,1], index: 1, kind: input, shape index: {}]
  %s2 = inlined_call_operand.vmem [shape: f32[1,4,1], index: 2, kind: input, shape index: {}]
  %s3 = inlined_call_operand.hbm [shape: f32[2,4,256], index: 3, kind: output, shape index: {}]
  %s4 = sld [smem:[#allocation0]]
  $region49: #{tpu_custom_call.1} parent=0
    _
  %s6 = ssub.s32 1, %s4
  %s7 = scalar_select 0, %s6, %s4
  $region1: #{tpu_custom_call.1} parent=0
    #allocation2 [shape = 'u8[4096]{0}', space=vmem, size = 0x1000, scoped, tag = 'input window, operand 0']
    #allocation3 [shape = 's32[2]{0}', space=sflag, size = 0x8, scoped, tag = 'scoped memory for tpu_custom_call.1']
    #allocation4 [shape = 's32[2]{0}', space=sflag, size = 0x8, scoped, tag = 'scoped memory for tpu_custom_call.1']
    #allocation5 [shape = 'u8[4096]{0}', space=vmem, size = 0x1000, scoped, tag = 'output window, operand 0']
    %8 = vsyncpa [#allocation3], 0
    %s9 = scalar_lea.sflag [#allocation3], 1
    %10 = vsyncpa %s9, 0
    %11 = vsyncpa [#allocation4], 0
    %s12 = scalar_lea.sflag [#allocation4], 1
    %13 = vsyncpa %s12, 0
    loop: start=0, step=1, limit=6
    $region2: #{tpu_custom_call.1} parent=1 // loop_pre_header
      _
    $region3: #{tpu_custom_call.1} parent=1 // loop_header
      %s15 = sphi 0, %s19
      %p16 = scmp.ge.s32.totalorder %s15, 6
      %s22 = sphi 0, %s34
      %s23 = sphi 0, %s30
      %s24 = sphi 0, %s22
      %s25 = sphi 0, %s23
      %s26 = sphi 0, %s24
      %s27 = sphi 0, %s25
      %s39 = sphi 0, %s41
      %s42 = sphi 0, %s39
      %s43 = sphi 0, %s42
      %s59 = sphi 0, %s43
      %s63 = sphi 0, %s63
      %s65 = sphi 0, %s63
      %s66 = sphi 0, %s65
      %s80 = sphi 0, %s66
      %s84 = sphi 0, %s84
      %s86 = sphi 0, %s84
      %s87 = sphi 0, %s86
      %s101 = sphi 0, %s87
      %s109 = sphi 0, %s111
      %s112 = sphi 0, %s109
      %s113 = sphi 0, %s112
      %s129 = sphi 0, %s113
    $region4: #{tpu_custom_call.1} parent=1 // loop_header_branch
      %18 = sbr.rel (%p16) target = $region8
    $region5: #{tpu_custom_call.1} parent=1 // loop_body
      %s20 = ssub.s32 %s15, 1
      %s21 = ssub.s32 %s15, 2
      %s28 = sadd.s32 1, %s23
      %p29 = scmp.ge.s32.totalorder %s28, 2
      %s30 = scalar_select %p29, 0, %s28
      %s31 = sadd.s32 1, %s22
      %s32 = scalar_select %p29, %s31, %s22
      %p33 = scmp.ge.s32.totalorder %s32, 2
      %s34 = scalar_select %p33, 0, %s32
      %s35 = ssub.s32 %s22, %s34
      %s36 = ssub.s32 %s23, %s30
      %s37 = sor.u32 %s35, %s36
      %p38 = scmp.eq.s32.totalorder %s37, 0
      %s40 = sadd.s32 %s39, 1
      %s41 = scalar_select %p38, %s39, %s40
      %p44 = pneg %p38
      %p45 = scmp.eq.s32.totalorder %s15, 3
      %p46 = por %p44, %p45
      %p47 = scmp.ne.s32.totalorder %s39, %s42
      %p48 = scmp.eq.s32.totalorder %s15, 0
      %p49 = por %p47, %p48
      %p50 = scmp.ne.s32.totalorder %s39, %s42
      %p51 = scmp.eq.s32.totalorder %s20, 3
      %p52 = por %p50, %p51
      %p53 = scmp.ne.s32.totalorder %s42, %s43
      %p54 = scmp.eq.s32.totalorder %s20, 0
      %p55 = por %p53, %p54
      %p56 = scmp.ne.s32.totalorder %s42, %s43
      %p57 = scmp.eq.s32.totalorder %s21, 3
      %p58 = por %p56, %p57
      %p60 = scmp.ne.s32.totalorder %s43, %s59
      %p61 = scmp.eq.s32.totalorder %s21, 0
      %p62 = por %p60, %p61
      %s64 = sadd.s32 %s63, 1
      %p67 = scmp.eq.s32.totalorder %s15, 3
      %p68 = scmp.ne.s32.totalorder %s63, %s65
      %p69 = scmp.eq.s32.totalorder %s15, 0
      %p70 = por %p68, %p69
      %p71 = scmp.ne.s32.totalorder %s63, %s65
      %p72 = scmp.eq.s32.totalorder %s20, 3
      %p73 = por %p71, %p72
      %p74 = scmp.ne.s32.totalorder %s65, %s66
      %p75 = scmp.eq.s32.totalorder %s20, 0
      %p76 = por %p74, %p75
      %p77 = scmp.ne.s32.totalorder %s65, %s66
      %p78 = scmp.eq.s32.totalorder %s21, 3
      %p79 = por %p77, %p78
      %p81 = scmp.ne.s32.totalorder %s66, %s80
      %p82 = scmp.eq.s32.totalorder %s21, 0
      %p83 = por %p81, %p82
      %s85 = sadd.s32 %s84, 1
      %p88 = scmp.eq.s32.totalorder %s15, 3
      %p89 = scmp.ne.s32.totalorder %s84, %s86
      %p90 = scmp.eq.s32.totalorder %s15, 0
      %p91 = por %p89, %p90
      %p92 = scmp.ne.s32.totalorder %s84, %s86
      %p93 = scmp.eq.s32.totalorder %s20, 3
      %p94 = por %p92, %p93
      %p95 = scmp.ne.s32.totalorder %s86, %s87
      %p96 = scmp.eq.s32.totalorder %s20, 0
      %p97 = por %p95, %p96
      %p98 = scmp.ne.s32.totalorder %s86, %s87
      %p99 = scmp.eq.s32.totalorder %s21, 3
      %p100 = por %p98, %p99
      %p102 = scmp.ne.s32.totalorder %s87, %s101
      %p103 = scmp.eq.s32.totalorder %s21, 0
      %p104 = por %p102, %p103
      %s105 = ssub.s32 %s22, %s34
      %s106 = ssub.s32 %s23, %s30
      %s107 = sor.u32 %s105, %s106
      %p108 = scmp.eq.s32.totalorder %s107, 0
      %s110 = sadd.s32 %s109, 1
      %s111 = scalar_select %p108, %s109, %s110
      %p114 = pneg %p108
      %p115 = scmp.eq.s32.totalorder %s15, 3
      %p116 = por %p114, %p115
      %p117 = scmp.ne.s32.totalorder %s109, %s112
      %p118 = scmp.eq.s32.totalorder %s15, 0
      %p119 = por %p117, %p118
      %p120 = scmp.ne.s32.totalorder %s109, %s112
      %p121 = scmp.eq.s32.totalorder %s20, 3
      %p122 = por %p120, %p121
      %p123 = scmp.ne.s32.totalorder %s112, %s113
      %p124 = scmp.eq.s32.totalorder %s20, 0
      %p125 = por %p123, %p124
      %p126 = scmp.ne.s32.totalorder %s112, %s113
      %p127 = scmp.eq.s32.totalorder %s21, 3
      %p128 = por %p126, %p127
      %p130 = scmp.ne.s32.totalorder %s113, %s129
      %p131 = scmp.eq.s32.totalorder %s21, 0
      %p132 = por %p130, %p131
      %p133 = scmp.le.s32.totalorder 1, %s15
      %p134 = scmp.lt.s32.totalorder %s15, 5
      %p135 = pnand %p133, %p134
      %p136 = pneg %p135
      // Predicated region
      $region9: #{tpu_custom_call.1} parent=5 // pred_check
        _
      $region10: #{tpu_custom_call.1} parent=5 // pred_check_branch
        %138 = sbr.rel (%p135) target = $region12
      $region11: #{tpu_custom_call.1} parent=5 // pred_region
        %s139 = ssub.s32 %s15, 1
        // Predicated region
        $region13: #{tpu_custom_call.1} parent=11 // pred_check
          %p140 = pneg %p76
        $region14: #{tpu_custom_call.1} parent=11 // pred_check_branch
          %142 = sbr.rel (%p140) target = $region16
        $region15: #{tpu_custom_call.1} parent=11 // pred_region
          _
        $region16: #{tpu_custom_call.1} parent=11 // pred_fallthru
          _
        // Predicated region
        $region17: #{tpu_custom_call.1} parent=11 // pred_check
          %p143 = pneg %p97
        $region18: #{tpu_custom_call.1} parent=11 // pred_check_branch
          %145 = sbr.rel (%p143) target = $region20
        $region19: #{tpu_custom_call.1} parent=11 // pred_region
          _
        $region20: #{tpu_custom_call.1} parent=11 // pred_fallthru
          _
      $region12: #{tpu_custom_call.1} parent=5 // pred_fallthru
        _
      %p146 = scmp.lt.s32.totalorder %s15, 4
      // Predicated region
      $region21: #{tpu_custom_call.1} parent=5 // pred_check
        %p147 = pneg %p146
      $region22: #{tpu_custom_call.1} parent=5 // pred_check_branch
        %149 = sbr.rel (%p147) target = $region24
      $region23: #{tpu_custom_call.1} parent=5 // pred_region
        // Predicated region
        $region25: #{tpu_custom_call.1} parent=23 // pred_check
          %p150 = pneg %p49
        $region26: #{tpu_custom_call.1} parent=23 // pred_check_branch
          %152 = sbr.rel (%p150) target = $region28
        $region27: #{tpu_custom_call.1} parent=23 // pred_region
          %s153 = sand.u32 %s39, 1
          %s154 = scalar_lea.sflag [#allocation3], %s153
          %s155 = sand.u32 %s39, 1
          %s156 = smul.addr %s155, 4
          %s157 = scalar_lea.vmem [#allocation2], %s156
          %s159 = ssub.s32 64, 64
          %160 = vsyncadd %s154, %s159
          %s161 = smul.addr %s22, 2
          %s162 = sadd.s32 %s23, %s161
          %s163 = smul.addr %s162, 64
          %s164 = scalar_lea.hbm %s0, %s163
          %s166 = sshll.u32 %s157, 4
          %s167 = int_to_ptr.vmem [resolvable:$true] %s166
          %169 = dma.hbm_to_vmem [thread:$0]  %s164, 64, %s167, %s154
        $region28: #{tpu_custom_call.1} parent=23 // pred_fallthru
          _
      $region24: #{tpu_custom_call.1} parent=5 // pred_fallthru
        _
      %p170 = scmp.le.s32.totalorder 1, %s15
      %p171 = scmp.lt.s32.totalorder %s15, 5
      %p172 = pnand %p170, %p171
      %p173 = pneg %p172
      // Predicated region
      $region29: #{tpu_custom_call.1} parent=5 // pred_check
        _
      $region30: #{tpu_custom_call.1} parent=5 // pred_check_branch
        %175 = sbr.rel (%p172) target = $region32
      $region31: #{tpu_custom_call.1} parent=5 // pred_region
        %s176 = ssub.s32 %s15, 1
        %s177 = sand.u32 %s42, 1
        %s178 = scalar_lea.sflag [#allocation3], %s177
        %s179 = sand.u32 %s42, 1
        %s180 = smul.addr %s179, 4
        %s181 = scalar_lea.vmem [#allocation2], %s180
        // Predicated region
        $region33: #{tpu_custom_call.1} parent=31 // pred_check
          %p182 = pneg %p55
        $region34: #{tpu_custom_call.1} parent=31 // pred_check_branch
          %184 = sbr.rel (%p182) target = $region36
        $region35: #{tpu_custom_call.1} parent=31 // pred_region
          %185 = dma.done %s178, 64
        $region36: #{tpu_custom_call.1} parent=31 // pred_fallthru
          _
        %s186 = sand.u32 %s42, 1
        %s187 = scalar_lea.sflag [#allocation3], %s186
        %s188 = sand.u32 %s42, 1
        %s189 = smul.addr %s188, 4
        %s190 = scalar_lea.vmem [#allocation2], %s189
        %p191 = pneg %p55
        %p192 = pneg %p52
        %p193 = pneg %p76
        %p194 = pneg %p73
        %p195 = pneg %p97
        %p196 = pneg %p94
        %p197 = pneg %p125
        %p198 = pneg %p122
        %s199 = sand.u32 %s112, 1
        %s200 = scalar_lea.sflag [#allocation4], %s199
        %s201 = sand.u32 %s112, 1
        %s202 = smul.addr %s201, 4
        %s203 = scalar_lea.vmem [#allocation5], %s202
        %v204 = vld [vmem:[%s181] sm:$0xf]
        %vm205 = vcmask 1043456
        %v206 = vsel %vm205, %v204, 0.0
        %v207 = vrot.slane %v206, 4
        %v208 = vadd.f32 %v206, %v207
        %v209 = vrot.slane %v208, 2
        %v210 = vadd.f32 %v208, %v209
        %v211 = vrot.slane %v210, 1
        %v212 = vadd.f32 %v210, %v211
        %v213 = vmul.f32 %v204, %v204
        %v214 = vsel %vm205, %v213, 0.0
        %v215 = vrot.slane %v214, 4
        %v216 = vadd.f32 %v214, %v215
        %v217 = vrot.slane %v216, 2
        %v218 = vadd.f32 %v216, %v217
        %v219 = vrot.slane %v218, 1
        %v220 = vadd.f32 %v218, %v219
        %v221 = vmul.f32 %v212, 0.25
        %v222 = vmul.f32 %v220, 0.25
        %v223 = vmul.f32 %v221, %v221
        %v224 = vsub.f32 %v222, %v223
        %v225 = vmax.f32 %v224, 0.0
        %v226 = vadd.f32 %v225, 1e-06
        %v227 = vrsqrt.pop %v226
        %v228 = vld [vmem:[%s1] sm:$0xf]
        %v229 = vld [vmem:[%s2] sm:$0xf]
        %v230 = vsub.f32 %v204, %v221
        %v231 = vmul.f32 %v230, %v227
        %233 = vset.pattern.permute.xlu0 0
        %234 = vperm.xlu0 %233, %v228
        %v235 = vpop.permute.xlu0 %234
        %v237 = vmul.f32 %v231, %v235
        %239 = vset.pattern.permute.xlu0 0
        %240 = vperm.xlu0 %239, %v229
        %v241 = vpop.permute.xlu0 %240
        %v243 = vadd.f32 %v237, %v241
        %244 = vst [vmem:[%s203] sm:$0xf] %v243
        %s245 = sand.u32 %s112, 1
        %s246 = scalar_lea.sflag [#allocation4], %s245
        %s247 = sand.u32 %s112, 1
        %s248 = smul.addr %s247, 4
        %s249 = scalar_lea.vmem [#allocation5], %s248
        // Predicated region
        $region37: #{tpu_custom_call.1} parent=31 // pred_check
          %p250 = pneg %p122
        $region38: #{tpu_custom_call.1} parent=31 // pred_check_branch
          %252 = sbr.rel (%p250) target = $region40
        $region39: #{tpu_custom_call.1} parent=31 // pred_region
          %s254 = ssub.s32 64, 64
          %255 = vsyncadd %s246, %s254
          %s256 = smul.addr %s24, 2
          %s257 = sadd.s32 %s25, %s256
          %s258 = smul.addr %s257, 64
          %s259 = scalar_lea.hbm %s3, %s258
          %s261 = sshll.u32 %s249, 4
          %s262 = int_to_ptr.vmem [resolvable:$true] %s261
          %264 = dma.vmem_to_hbm [thread:$0]  %s262, 64, %s259, %s246
        $region40: #{tpu_custom_call.1} parent=31 // pred_fallthru
          _
      $region32: #{tpu_custom_call.1} parent=5 // pred_fallthru
        _
      %p265 = scmp.le.s32.totalorder 2, %s15
      // Predicated region
      $region41: #{tpu_custom_call.1} parent=5 // pred_check
        %p266 = pneg %p265
      $region42: #{tpu_custom_call.1} parent=5 // pred_check_branch
        %268 = sbr.rel (%p266) target = $region44
      $region43: #{tpu_custom_call.1} parent=5 // pred_region
        %s269 = ssub.s32 %s15, 2
        // Predicated region
        $region45: #{tpu_custom_call.1} parent=43 // pred_check
          %p270 = pneg %p128
        $region46: #{tpu_custom_call.1} parent=43 // pred_check_branch
          %272 = sbr.rel (%p270) target = $region48
        $region47: #{tpu_custom_call.1} parent=43 // pred_region
          %s273 = sand.u32 %s113, 1
          %s274 = scalar_lea.sflag [#allocation4], %s273
          %s275 = sand.u32 %s113, 1
          %s276 = smul.addr %s275, 4
          %s277 = scalar_lea.vmem [#allocation5], %s276
          %278 = dma.done %s274, 64
        $region48: #{tpu_custom_call.1} parent=43 // pred_fallthru
          _
      $region44: #{tpu_custom_call.1} parent=5 // pred_fallthru
        _
    $region6: #{tpu_custom_call.1} parent=1 // loop_footer
      %s19 = sadd.s32 1, %s15
    $region7: #{tpu_custom_call.1} parent=1 // loop_footer_branch
      %14 = sbr.rel target = $region3
    $region8: #{tpu_custom_call.1} parent=1 // loop_exit
      _
    %279 = vsyncpa [#allocation3], 1
    %s280 = scalar_lea.sflag [#allocation3], 1
    %281 = vsyncpa %s280, 1
    %282 = vsyncpa [#allocation4], 1
    %s283 = scalar_lea.sflag [#allocation4], 1
    %284 = vsyncpa %s283, 1

</llo_original>
